<compile_context>
chip_gen: v5e
topology: v5e:2x2
jax: 0.10.0
libtpu: 0.0.40
codegen_flags: <defaults>
</compile_context>

<pallas_src>
import functools
import math

import jax
import jax.numpy as jnp
from jax.experimental import pallas as pl
from jax.experimental.pallas import tpu as pltpu

BN_EPS = 1e-5


# ----------------------------------------------------------------------------- kernels

def _silu_bn(v, bias, scale, shift):
    # v -> SiLU(v + bias) * bn_scale + bn_shift   (BN folded to scale/shift, eval mode)
    v = v + bias
    v = v * pl.reciprocal(1.0 + jnp.exp(-v), approx=True)   # sigmoid via EUP recip
    return v * scale + shift


def _branch_kernel(Wo, depth, patT_ref, cmask_ref, w0_ref, post0_ref,
                   dww_ref, dwpost_ref, pww_ref, pwpost_ref, y_ref, zpad_ref):
    """Fused DCovN branch for one batch element (grid axis = batch, parallel).

    patT_ref : (1, C*p*p, S)   im2col patches, S = Ho*Wo on the lane dim
    cmask_ref: (3, 1, S)       column-validity masks for dw = -1 / 0 / +1 taps
    w0_ref   : (C, C*p*p)      patch conv as a matmul
    post0_ref: (3, C, 1)       [bias, bn_scale, bn_shift] of the patch conv
    dww_ref  : (depth, 9, C, 1)   depthwise 3x3 taps (t = kh*3 + kw)
    dwpost_ref, pwpost_ref : (depth, 3, C, 1)
    pww_ref  : (depth, C, C)   1x1 pointwise weights
    y_ref    : (1, C, 1)       per-batch spatial mean of the branch output
    zpad_ref : (C, S + 2*(Wo+1)) VMEM scratch: flattened-spatial halo buffer
    """
    S = patT_ref.shape[2]
    pad = Wo + 1

    post0 = post0_ref[...]
    dww = dww_ref[...]
    dwpost = dwpost_ref[...]
    pww = pww_ref[...]
    pwpost = pwpost_ref[...]
    cmask = cmask_ref[...]

    # Patch conv as a lane-dense matmul: (C, Cpp) @ (Cpp, S) -> (C, S).
    z = jnp.dot(w0_ref[...], patT_ref[0], preferred_element_type=jnp.float32)
    z = _silu_bn(z, post0[0], post0[1], post0[2])

    for d in range(depth):
        # Depthwise 3x3: shifts along the flattened spatial axis are read from a
        # zero-padded VMEM scratch (handles the row halo); column halo via masks.
        zpad_ref[...] = jnp.zeros_like(zpad_ref)
        zpad_ref[:, pad:pad + S] = z
        zp = zpad_ref[...]

        acc = jnp.zeros_like(z)
        for t in range(9):
            dh, dw = t // 3 - 1, t % 3 - 1
            off = pad + dh * Wo + dw                      # static offset
            shifted = zp[:, off:off + S]                  # (C, S)
            if dw != 0:
                shifted = shifted * cmask[dw + 1]         # (1, S) broadcast
            acc = acc + dww[d, t] * shifted               # (C, 1) broadcast
        r = _silu_bn(acc, dwpost[d, 0], dwpost[d, 1], dwpost[d, 2]) + z   # residual

        # 1x1 pointwise conv as (C, C) @ (C, S), lane-dense output.
        z = jnp.dot(pww[d], r, preferred_element_type=jnp.float32)
        z = _silu_bn(z, pwpost[d, 0], pwpost[d, 1], pwpost[d, 2])

    # Fused adaptive avg-pool to 1x1 (spatial mean over the lane axis).
    y_ref[0] = jnp.sum(z, axis=1, keepdims=True) * (1.0 / S)


def _fc_scale_kernel(x_ref, y0_ref, y1_ref, y2_ref, w1_ref, w2_ref, o_ref):
    """Fused: y4 = mean(x), squeeze-excite FC, exp, broadcast multiply (per batch)."""
    xb = x_ref[0]                                          # (C, HW), HW on the lane
    hw = x_ref.shape[2]
    y4 = jnp.sum(xb, axis=1, keepdims=True) * (1.0 / hw)   # (C, 1)
    y = (y0_ref[0] + y1_ref[0] + y2_ref[0] + y4) * 0.25    # (C, 1)
    h = jnp.maximum(jnp.dot(w1_ref[...], y, preferred_element_type=jnp.float32), 0.0)
    s = jnp.dot(w2_ref[...], h, preferred_element_type=jnp.float32)
    s = 1.0 / (1.0 + jnp.exp(-s))                          # exact sigmoid (tiny (C,1))
    o_ref[0] = xb * jnp.exp(s)                             # lane-dense store


# ----------------------------------------------------------------------------- wrappers

def _fold_bn(bn):
    scale = bn["gamma"] / jnp.sqrt(bn["var"] + BN_EPS)
    shift = bn["beta"] - bn["mean"] * scale
    return scale, shift


def _branch_params(bp, C, p):
    """Pack one branch's parameters into a handful of small kernel operands."""
    depth = len(bp["blocks"])
    Cpp = C * p * p
    w0 = bp["pconv_w"].reshape(C, Cpp).astype(jnp.float32)          # (C, C*p*p)
    sc0, sh0 = _fold_bn(bp["bn0"])
    post0 = jnp.stack([bp["pconv_b"], sc0, sh0]).reshape(3, C, 1)
    dww = jnp.stack([blk["dw_w"][:, 0].reshape(C, 9).T for blk in bp["blocks"]])
    dww = dww.reshape(depth, 9, C, 1)
    dwpost = jnp.stack(
        [jnp.stack([blk["dw_b"], *_fold_bn(blk["bn1"])]) for blk in bp["blocks"]]
    ).reshape(depth, 3, C, 1)
    pww = jnp.stack([blk["pw_w"][:, :, 0, 0] for blk in bp["blocks"]])   # (depth, C, C)
    pwpost = jnp.stack(
        [jnp.stack([blk["pw_b"], *_fold_bn(blk["bn2"])]) for blk in bp["blocks"]]
    ).reshape(depth, 3, C, 1)
    return w0, post0, dww, dwpost, pww, pwpost


def _run_branch(x, bp, p):
    """One fused pallas_call: patch conv + depth residual blocks + spatial mean."""
    B, C, H, W = x.shape
    Ho, Wo = H // p, W // p
    S = Ho * Wo
    Cpp = C * p * p
    depth = len(bp["blocks"])

    # im2col for the stride==kernel patch conv, transposed so S sits on the lane dim.
    # TODO(synk): at production sizes fold this gather into the kernel via manual DMA.
    xc = x[:, :, :Ho * p, :Wo * p]
    patT = (xc.reshape(B, C, Ho, p, Wo, p)
              .transpose(0, 1, 3, 5, 2, 4)                 # (B, C, kh, kw, Ho, Wo)
              .reshape(B, Cpp, S))

    w0, post0, dww, dwpost, pww, pwpost = _branch_params(bp, C, p)

    # Column-validity masks for the flattened-spatial depthwise shifts.
    j = jnp.arange(S, dtype=jnp.int32) % Wo
    cmask = jnp.stack([(j >= 1).astype(jnp.float32),
                       jnp.ones((S,), jnp.float32),
                       (j <= Wo - 2).astype(jnp.float32)]).reshape(3, 1, S)

    kernel = functools.partial(_branch_kernel, Wo, depth)
    return pl.pallas_call(
        kernel,
        out_shape=jax.ShapeDtypeStruct((B, C, 1), jnp.float32),
        grid=(B,),
        in_specs=[
            pl.BlockSpec((1, Cpp, S), lambda b: (b, 0, 0)),
            pl.BlockSpec((3, 1, S), lambda b: (0, 0, 0)),
            pl.BlockSpec((C, Cpp), lambda b: (0, 0)),
            pl.BlockSpec((3, C, 1), lambda b: (0, 0, 0)),
            pl.BlockSpec((depth, 9, C, 1), lambda b: (0, 0, 0, 0)),
            pl.BlockSpec((depth, 3, C, 1), lambda b: (0, 0, 0, 0)),
            pl.BlockSpec((depth, C, C), lambda b: (0, 0, 0)),
            pl.BlockSpec((depth, 3, C, 1), lambda b: (0, 0, 0, 0)),
        ],
        out_specs=pl.BlockSpec((1, C, 1), lambda b: (b, 0, 0)),
        scratch_shapes=[pltpu.VMEM((C, S + 2 * (Wo + 1)), jnp.float32)],
        compiler_params=pltpu.CompilerParams(dimension_semantics=("parallel",)),
    )(patT, cmask, w0, post0, dww, dwpost, pww, pwpost)


def _fc_scale(xf, y0, y1, y2, w1, w2):
    """Fused y4-mean + FC + exp + broadcast scale; output aliased onto x."""
    B, C, HW = xf.shape
    Cr = w1.shape[0]
    # TODO(synk): at production HW, tile the HW axis (two-pass mean) and set
    #             vmem_limit_bytes; a whole-row block is fine at these sizes.
    return pl.pallas_call(
        _fc_scale_kernel,
        out_shape=jax.ShapeDtypeStruct((B, C, HW), jnp.float32),
        grid=(B,),
        in_specs=[
            pl.BlockSpec((1, C, HW), lambda b: (b, 0, 0)),
            pl.BlockSpec((1, C, 1), lambda b: (b, 0, 0)),
            pl.BlockSpec((1, C, 1), lambda b: (b, 0, 0)),
            pl.BlockSpec((1, C, 1), lambda b: (b, 0, 0)),
            pl.BlockSpec((Cr, C), lambda b: (0, 0)),
            pl.BlockSpec((C, Cr), lambda b: (0, 0)),
        ],
        out_specs=pl.BlockSpec((1, C, HW), lambda b: (b, 0, 0)),
        input_output_aliases={0: 0},
        compiler_params=pltpu.CompilerParams(dimension_semantics=("parallel",)),
    )(xf, y0, y1, y2, w1, w2)


def multiseam_pallas(x_nchw, params):
    B, C, H, W = x_nchw.shape
    x = x_nchw.astype(jnp.float32)                       # stays NCHW (lane = W / HW)
    y0 = _run_branch(x, params["b0"], 3)                 # (B, C, 1)
    y1 = _run_branch(x, params["b1"], 5)
    y2 = _run_branch(x, params["b2"], 7)
    out = _fc_scale(x.reshape(B, C, H * W), y0, y1, y2,
                    params["fc_w1"], params["fc_w2"])
    return out.reshape(B, C, H, W)


# ----------------------------------------------------------------------------- params

def _init_bn(key, c):
    k1, k2, k3, k4 = jax.random.split(key, 4)
    return dict(
        gamma=1.0 + 0.1 * jax.random.normal(k1, (c,), jnp.float32),
        beta=0.1 * jax.random.normal(k2, (c,), jnp.float32),
        mean=0.1 * jax.random.normal(k3, (c,), jnp.float32),
        var=1.0 + 0.1 * jnp.abs(jax.random.normal(k4, (c,), jnp.float32)),
    )


def _init_branch(key, c, depth, patch):
    keys = jax.random.split(key, 3 + depth)
    fan = c * patch * patch
    p = dict(
        pconv_w=jax.random.normal(keys[0], (c, c, patch, patch), jnp.float32) / math.sqrt(fan),
        pconv_b=0.05 * jax.random.normal(keys[1], (c,), jnp.float32),
        bn0=_init_bn(keys[2], c),
        blocks=[],
    )
    for d in range(depth):
        bk = jax.random.split(keys[3 + d], 6)
        p["blocks"].append(dict(
            dw_w=jax.random.normal(bk[0], (c, 1, 3, 3), jnp.float32) / 3.0,
            dw_b=0.05 * jax.random.normal(bk[1], (c,), jnp.float32),
            bn1=_init_bn(bk[2], c),
            pw_w=jax.random.normal(bk[3], (c, c, 1, 1), jnp.float32) / math.sqrt(c),
            pw_b=0.05 * jax.random.normal(bk[4], (c,), jnp.float32),
            bn2=_init_bn(bk[5], c),
        ))
    return p


def init_params(key, c, depth, reduction=16):
    kb0, kb1, kb2, kf1, kf2 = jax.random.split(key, 5)
    cr = max(c // reduction, 1)
    return dict(
        b0=_init_branch(kb0, c, depth, 3),
        b1=_init_branch(kb1, c, depth, 5),
        b2=_init_branch(kb2, c, depth, 7),
        fc_w1=jax.random.normal(kf1, (cr, c), jnp.float32) / math.sqrt(c),   # Linear(c, c//r)
        fc_w2=jax.random.normal(kf2, (c, cr), jnp.float32) / math.sqrt(cr),  # Linear(c//r, c)
    )


# ----------------------------------------------------------------------------- pure-JAX reference

def multiseam_ref(x, params):
    def bnf(z, bn):
        s = bn["gamma"] / jnp.sqrt(bn["var"] + BN_EPS)
        return (z - bn["mean"][None, :, None, None]) * s[None, :, None, None] \
               + bn["beta"][None, :, None, None]

    def silu(z):
        return z * jax.nn.sigmoid(z)

    def conv(z, w, stride, pad, groups=1):
        return jax.lax.conv_general_dilated(
            z, w, (stride, stride), pad,
            dimension_numbers=("NCHW", "OIHW", "NCHW"),
            feature_group_count=groups,
            precision=jax.lax.Precision.HIGHEST)

    B, C, H, W = x.shape

    def dcovn(z, bp, patch):
        z = conv(z, bp["pconv_w"], patch, "VALID") + bp["pconv_b"][None, :, None, None]
        z = bnf(silu(z), bp["bn0"])
        for blk in bp["blocks"]:
            r = conv(z, blk["dw_w"], 1, ((1, 1), (1, 1)), groups=C) + blk["dw_b"][None, :, None, None]
            r = bnf(silu(r), blk["bn1"]) + z
            z = conv(r, blk["pw_w"], 1, "VALID") + blk["pw_b"][None, :, None, None]
            z = bnf(silu(z), blk["bn2"])
        return z

    y0 = dcovn(x, params["b0"], 3).mean(axis=(2, 3))
    y1 = dcovn(x, params["b1"], 5).mean(axis=(2, 3))
    y2 = dcovn(x, params["b2"], 7).mean(axis=(2, 3))
    y4 = x.mean(axis=(2, 3))
    y = (y0 + y1 + y2 + y4) / 4.0
    h = jnp.maximum(jnp.dot(y, params["fc_w1"].T, precision=jax.lax.Precision.HIGHEST), 0.0)
    s = jax.nn.sigmoid(jnp.dot(h, params["fc_w2"].T, precision=jax.lax.Precision.HIGHEST))
    return x * jnp.exp(s)[:, :, None, None]


# ----------------------------------------------------------------------------- main

if __name__ == "__main__":
    key = jax.random.PRNGKey(0)
    B, C, H, W = 2, 16, 21, 21          # c1 == c2 == 16, reduction=16 -> hidden=1
    depth = 1
    kx, kp = jax.random.split(key)
    x = jax.random.normal(kx, (B, C, H, W), jnp.float32)
    params = init_params(kp, C, depth, reduction=16)

    out = multiseam_pallas(x, params)
    out = jax.block_until_ready(out)

    ref = multiseam_ref(x, params)
    err = float(jnp.max(jnp.abs(out - ref)))
    assert out.shape == x.shape, (out.shape, x.shape)
    assert err < 1e-2, f"max abs err {err}"
    print("KERNEL_OK")
</pallas_src>

<mosaic_0001>
module attributes {stable_mosaic.version = 11 : i64} {
  func.func @_branch_kernel(%arg0: i32, %arg1: memref<1x144x49xf32, #tpu.memory_space<vmem>>, %arg2: memref<3x1x49xf32, #tpu.memory_space<vmem>>, %arg3: memref<16x144xf32, #tpu.memory_space<vmem>>, %arg4: memref<3x16x1xf32, #tpu.memory_space<vmem>>, %arg5: memref<1x9x16x1xf32, #tpu.memory_space<vmem>>, %arg6: memref<1x3x16x1xf32, #tpu.memory_space<vmem>>, %arg7: memref<1x16x16xf32, #tpu.memory_space<vmem>>, %arg8: memref<1x3x16x1xf32, #tpu.memory_space<vmem>>, %arg9: memref<1x16x1xf32, #tpu.memory_space<vmem>>, %arg10: memref<16x65xf32, #tpu.memory_space<vmem>>) attributes {dimension_semantics = [#tpu.dimension_semantics<parallel>], iteration_bounds = array<i64: 2>, scalar_prefetch = 0 : i64, scratch_operands = 1 : i64, tpu.core_type = #tpu.core_type<tc>, window_params = [{transform_indices = @transform_0, window_bounds = array<i64: 1, 144, 49>}, {pipeline_mode = #tpu.pipeline_mode<synchronous>, transform_indices = @transform_1, window_bounds = array<i64: 3, 1, 49>}, {pipeline_mode = #tpu.pipeline_mode<synchronous>, transform_indices = @transform_2, window_bounds = array<i64: 16, 144>}, {pipeline_mode = #tpu.pipeline_mode<synchronous>, transform_indices = @transform_3, window_bounds = array<i64: 3, 16, 1>}, {pipeline_mode = #tpu.pipeline_mode<synchronous>, transform_indices = @transform_4, window_bounds = array<i64: 1, 9, 16, 1>}, {pipeline_mode = #tpu.pipeline_mode<synchronous>, transform_indices = @transform_5, window_bounds = array<i64: 1, 3, 16, 1>}, {pipeline_mode = #tpu.pipeline_mode<synchronous>, transform_indices = @transform_6, window_bounds = array<i64: 1, 16, 16>}, {pipeline_mode = #tpu.pipeline_mode<synchronous>, transform_indices = @transform_7, window_bounds = array<i64: 1, 3, 16, 1>}, {transform_indices = @transform_8, window_bounds = array<i64: 1, 16, 1>}]} {
    %c0 = arith.constant 0 : index
    %c0_0 = arith.constant 0 : index
    %c0_1 = arith.constant 0 : index
    %0 = vector.load %arg4[%c0, %c0_0, %c0_1] : memref<3x16x1xf32, #tpu.memory_space<vmem>>, vector<3x16x1xf32>
    %c0_2 = arith.constant 0 : index
    %c0_3 = arith.constant 0 : index
    %c0_4 = arith.constant 0 : index
    %c0_5 = arith.constant 0 : index
    %1 = vector.load %arg5[%c0_2, %c0_3, %c0_4, %c0_5] : memref<1x9x16x1xf32, #tpu.memory_space<vmem>>, vector<1x9x16x1xf32>
    %c0_6 = arith.constant 0 : index
    %c0_7 = arith.constant 0 : index
    %c0_8 = arith.constant 0 : index
    %c0_9 = arith.constant 0 : index
    %2 = vector.load %arg6[%c0_6, %c0_7, %c0_8, %c0_9] : memref<1x3x16x1xf32, #tpu.memory_space<vmem>>, vector<1x3x16x1xf32>
    %c0_10 = arith.constant 0 : index
    %c0_11 = arith.constant 0 : index
    %c0_12 = arith.constant 0 : index
    %3 = vector.load %arg7[%c0_10, %c0_11, %c0_12] : memref<1x16x16xf32, #tpu.memory_space<vmem>>, vector<1x16x16xf32>
    %c0_13 = arith.constant 0 : index
    %c0_14 = arith.constant 0 : index
    %c0_15 = arith.constant 0 : index
    %c0_16 = arith.constant 0 : index
    %4 = vector.load %arg8[%c0_13, %c0_14, %c0_15, %c0_16] : memref<1x3x16x1xf32, #tpu.memory_space<vmem>>, vector<1x3x16x1xf32>
    %c0_17 = arith.constant 0 : index
    %c0_18 = arith.constant 0 : index
    %c0_19 = arith.constant 0 : index
    %5 = vector.load %arg2[%c0_17, %c0_18, %c0_19] : memref<3x1x49xf32, #tpu.memory_space<vmem>>, vector<3x1x49xf32>
    %c0_20 = arith.constant 0 : index
    %c0_21 = arith.constant 0 : index
    %6 = vector.load %arg3[%c0_20, %c0_21] : memref<16x144xf32, #tpu.memory_space<vmem>>, vector<16x144xf32>
    %c0_22 = arith.constant 0 : index
    %c0_23 = arith.constant 0 : index
    %c0_24 = arith.constant 0 : index
    %7 = vector.load %arg1[%c0_22, %c0_23, %c0_24] : memref<1x144x49xf32, #tpu.memory_space<vmem>>, vector<1x144x49xf32>
    %8 = vector.shape_cast %7 : vector<1x144x49xf32> to vector<144x49xf32>
    %cst = arith.constant dense<0.000000e+00> : vector<16x49xf32>
    %9 = tpu.matmul %6, %8, %cst {dimension_numbers = #tpu.dot_dimension_numbers<[1], [0], [0], [1], [0, 0, 1, 1], [], []>} : vector<16x144xf32>, vector<144x49xf32>, vector<16x49xf32> -> vector<16x49xf32>
    %10 = vector.extract_strided_slice %0 {offsets = [0, 0, 0], sizes = [1, 16, 1], strides = [1, 1, 1]} : vector<3x16x1xf32> to vector<1x16x1xf32>
    %11 = vector.shape_cast %10 : vector<1x16x1xf32> to vector<16x1xf32>
    %12 = vector.extract_strided_slice %0 {offsets = [1, 0, 0], sizes = [1, 16, 1], strides = [1, 1, 1]} : vector<3x16x1xf32> to vector<1x16x1xf32>
    %13 = vector.shape_cast %12 : vector<1x16x1xf32> to vector<16x1xf32>
    %14 = vector.extract_strided_slice %0 {offsets = [2, 0, 0], sizes = [1, 16, 1], strides = [1, 1, 1]} : vector<3x16x1xf32> to vector<1x16x1xf32>
    %15 = vector.shape_cast %14 : vector<1x16x1xf32> to vector<16x1xf32>
    %16 = vector.broadcast %11 : vector<16x1xf32> to vector<16x49xf32>
    %17 = arith.addf %9, %16 : vector<16x49xf32>
    %cst_25 = arith.constant 0.000000e+00 : f32
    %18 = vector.broadcast %cst_25 : f32 to vector<16x49xf32>
    %19 = arith.subf %18, %17 : vector<16x49xf32>
    %20 = math.exp %19 : vector<16x49xf32>
    %cst_26 = arith.constant 1.000000e+00 : f32
    %21 = vector.broadcast %cst_26 : f32 to vector<16x49xf32>
    %22 = arith.addf %21, %20 : vector<16x49xf32>
    %23 = tpu.reciprocal %22 {approx = true} : vector<16x49xf32> -> vector<16x49xf32>
    %24 = arith.mulf %17, %23 : vector<16x49xf32>
    %25 = vector.broadcast %13 : vector<16x1xf32> to vector<16x49xf32>
    %26 = arith.mulf %24, %25 : vector<16x49xf32>
    %27 = vector.broadcast %15 : vector<16x1xf32> to vector<16x49xf32>
    %28 = arith.addf %26, %27 : vector<16x49xf32>
    %cst_27 = arith.constant 0.000000e+00 : f32
    %29 = vector.broadcast %cst_27 : f32 to vector<16x65xf32>
    %c0_28 = arith.constant 0 : index
    %c0_29 = arith.constant 0 : index
    %30 = vector.load %arg10[%c0_28, %c0_29] : memref<16x65xf32, #tpu.memory_space<vmem>>, vector<16x65xf32>
    tpu.vector_store %arg10[%c0_28, %c0_29], %29 {strides = array<i32>} : memref<16x65xf32, #tpu.memory_space<vmem>>, vector<16x65xf32>,
    %c0_30 = arith.constant 0 : index
    %c8 = arith.constant 8 : index
    %31 = vector.load %arg10[%c0_30, %c8] : memref<16x65xf32, #tpu.memory_space<vmem>>, vector<16x49xf32>
    tpu.vector_store %arg10[%c0_30, %c8], %28 {strides = array<i32>} : memref<16x65xf32, #tpu.memory_space<vmem>>, vector<16x49xf32>,
    %c0_31 = arith.constant 0 : index
    %c0_32 = arith.constant 0 : index
    %32 = vector.load %arg10[%c0_31, %c0_32] : memref<16x65xf32, #tpu.memory_space<vmem>>, vector<16x65xf32>
    %cst_33 = arith.constant 0.000000e+00 : f32
    %33 = vector.broadcast %cst_33 : f32 to vector<16x49xf32>
    %34 = vector.extract_strided_slice %32 {offsets = [0, 0], sizes = [16, 49], strides = [1, 1]} : vector<16x65xf32> to vector<16x49xf32>
    %35 = vector.extract_strided_slice %5 {offsets = [0, 0, 0], sizes = [1, 1, 49], strides = [1, 1, 1]} : vector<3x1x49xf32> to vector<1x1x49xf32>
    %36 = vector.shape_cast %35 : vector<1x1x49xf32> to vector<1x49xf32>
    %37 = vector.broadcast %36 : vector<1x49xf32> to vector<16x49xf32>
    %38 = arith.mulf %34, %37 : vector<16x49xf32>
    %39 = vector.extract_strided_slice %1 {offsets = [0, 0, 0, 0], sizes = [1, 1, 16, 1], strides = [1, 1, 1, 1]} : vector<1x9x16x1xf32> to vector<1x1x16x1xf32>
    %40 = vector.shape_cast %39 : vector<1x1x16x1xf32> to vector<16x1xf32>
    %41 = vector.broadcast %40 : vector<16x1xf32> to vector<16x49xf32>
    %42 = arith.mulf %41, %38 : vector<16x49xf32>
    %43 = arith.addf %33, %42 : vector<16x49xf32>
    %44 = vector.extract_strided_slice %32 {offsets = [0, 1], sizes = [16, 49], strides = [1, 1]} : vector<16x65xf32> to vector<16x49xf32>
    %45 = vector.extract_strided_slice %1 {offsets = [0, 1, 0, 0], sizes = [1, 1, 16, 1], strides = [1, 1, 1, 1]} : vector<1x9x16x1xf32> to vector<1x1x16x1xf32>
    %46 = vector.shape_cast %45 : vector<1x1x16x1xf32> to vector<16x1xf32>
    %47 = vector.broadcast %46 : vector<16x1xf32> to vector<16x49xf32>
    %48 = arith.mulf %47, %44 : vector<16x49xf32>
    %49 = arith.addf %43, %48 : vector<16x49xf32>
    %50 = vector.extract_strided_slice %32 {offsets = [0, 2], sizes = [16, 49], strides = [1, 1]} : vector<16x65xf32> to vector<16x49xf32>
    %51 = vector.extract_strided_slice %5 {offsets = [2, 0, 0], sizes = [1, 1, 49], strides = [1, 1, 1]} : vector<3x1x49xf32> to vector<1x1x49xf32>
    %52 = vector.shape_cast %51 : vector<1x1x49xf32> to vector<1x49xf32>
    %53 = vector.broadcast %52 : vector<1x49xf32> to vector<16x49xf32>
    %54 = arith.mulf %50, %53 : vector<16x49xf32>
    %55 = vector.extract_strided_slice %1 {offsets = [0, 2, 0, 0], sizes = [1, 1, 16, 1], strides = [1, 1, 1, 1]} : vector<1x9x16x1xf32> to vector<1x1x16x1xf32>
    %56 = vector.shape_cast %55 : vector<1x1x16x1xf32> to vector<16x1xf32>
    %57 = vector.broadcast %56 : vector<16x1xf32> to vector<16x49xf32>
    %58 = arith.mulf %57, %54 : vector<16x49xf32>
    %59 = arith.addf %49, %58 : vector<16x49xf32>
    %60 = vector.extract_strided_slice %32 {offsets = [0, 7], sizes = [16, 49], strides = [1, 1]} : vector<16x65xf32> to vector<16x49xf32>
    %61 = vector.extract_strided_slice %5 {offsets = [0, 0, 0], sizes = [1, 1, 49], strides = [1, 1, 1]} : vector<3x1x49xf32> to vector<1x1x49xf32>
    %62 = vector.shape_cast %61 : vector<1x1x49xf32> to vector<1x49xf32>
    %63 = vector.broadcast %62 : vector<1x49xf32> to vector<16x49xf32>
    %64 = arith.mulf %60, %63 : vector<16x49xf32>
    %65 = vector.extract_strided_slice %1 {offsets = [0, 3, 0, 0], sizes = [1, 1, 16, 1], strides = [1, 1, 1, 1]} : vector<1x9x16x1xf32> to vector<1x1x16x1xf32>
    %66 = vector.shape_cast %65 : vector<1x1x16x1xf32> to vector<16x1xf32>
    %67 = vector.broadcast %66 : vector<16x1xf32> to vector<16x49xf32>
    %68 = arith.mulf %67, %64 : vector<16x49xf32>
    %69 = arith.addf %59, %68 : vector<16x49xf32>
    %70 = vector.extract_strided_slice %32 {offsets = [0, 8], sizes = [16, 49], strides = [1, 1]} : vector<16x65xf32> to vector<16x49xf32>
    %71 = vector.extract_strided_slice %1 {offsets = [0, 4, 0, 0], sizes = [1, 1, 16, 1], strides = [1, 1, 1, 1]} : vector<1x9x16x1xf32> to vector<1x1x16x1xf32>
    %72 = vector.shape_cast %71 : vector<1x1x16x1xf32> to vector<16x1xf32>
    %73 = vector.broadcast %72 : vector<16x1xf32> to vector<16x49xf32>
    %74 = arith.mulf %73, %70 : vector<16x49xf32>
    %75 = arith.addf %69, %74 : vector<16x49xf32>
    %76 = vector.extract_strided_slice %32 {offsets = [0, 9], sizes = [16, 49], strides = [1, 1]} : vector<16x65xf32> to vector<16x49xf32>
    %77 = vector.extract_strided_slice %5 {offsets = [2, 0, 0], sizes = [1, 1, 49], strides = [1, 1, 1]} : vector<3x1x49xf32> to vector<1x1x49xf32>
    %78 = vector.shape_cast %77 : vector<1x1x49xf32> to vector<1x49xf32>
    %79 = vector.broadcast %78 : vector<1x49xf32> to vector<16x49xf32>
    %80 = arith.mulf %76, %79 : vector<16x49xf32>
    %81 = vector.extract_strided_slice %1 {offsets = [0, 5, 0, 0], sizes = [1, 1, 16, 1], strides = [1, 1, 1, 1]} : vector<1x9x16x1xf32> to vector<1x1x16x1xf32>
    %82 = vector.shape_cast %81 : vector<1x1x16x1xf32> to vector<16x1xf32>
    %83 = vector.broadcast %82 : vector<16x1xf32> to vector<16x49xf32>
    %84 = arith.mulf %83, %80 : vector<16x49xf32>
    %85 = arith.addf %75, %84 : vector<16x49xf32>
    %86 = vector.extract_strided_slice %32 {offsets = [0, 14], sizes = [16, 49], strides = [1, 1]} : vector<16x65xf32> to vector<16x49xf32>
    %87 = vector.extract_strided_slice %5 {offsets = [0, 0, 0], sizes = [1, 1, 49], strides = [1, 1, 1]} : vector<3x1x49xf32> to vector<1x1x49xf32>
    %88 = vector.shape_cast %87 : vector<1x1x49xf32> to vector<1x49xf32>
    %89 = vector.broadcast %88 : vector<1x49xf32> to vector<16x49xf32>
    %90 = arith.mulf %86, %89 : vector<16x49xf32>
    %91 = vector.extract_strided_slice %1 {offsets = [0, 6, 0, 0], sizes = [1, 1, 16, 1], strides = [1, 1, 1, 1]} : vector<1x9x16x1xf32> to vector<1x1x16x1xf32>
    %92 = vector.shape_cast %91 : vector<1x1x16x1xf32> to vector<16x1xf32>
    %93 = vector.broadcast %92 : vector<16x1xf32> to vector<16x49xf32>
    %94 = arith.mulf %93, %90 : vector<16x49xf32>
    %95 = arith.addf %85, %94 : vector<16x49xf32>
    %96 = vector.extract_strided_slice %32 {offsets = [0, 15], sizes = [16, 49], strides = [1, 1]} : vector<16x65xf32> to vector<16x49xf32>
    %97 = vector.extract_strided_slice %1 {offsets = [0, 7, 0, 0], sizes = [1, 1, 16, 1], strides = [1, 1, 1, 1]} : vector<1x9x16x1xf32> to vector<1x1x16x1xf32>
    %98 = vector.shape_cast %97 : vector<1x1x16x1xf32> to vector<16x1xf32>
    %99 = vector.broadcast %98 : vector<16x1xf32> to vector<16x49xf32>
    %100 = arith.mulf %99, %96 : vector<16x49xf32>
    %101 = arith.addf %95, %100 : vector<16x49xf32>
    %102 = vector.extract_strided_slice %32 {offsets = [0, 16], sizes = [16, 49], strides = [1, 1]} : vector<16x65xf32> to vector<16x49xf32>
    %103 = vector.extract_strided_slice %5 {offsets = [2, 0, 0], sizes = [1, 1, 49], strides = [1, 1, 1]} : vector<3x1x49xf32> to vector<1x1x49xf32>
    %104 = vector.shape_cast %103 : vector<1x1x49xf32> to vector<1x49xf32>
    %105 = vector.broadcast %104 : vector<1x49xf32> to vector<16x49xf32>
    %106 = arith.mulf %102, %105 : vector<16x49xf32>
    %107 = vector.extract_strided_slice %1 {offsets = [0, 8, 0, 0], sizes = [1, 1, 16, 1], strides = [1, 1, 1, 1]} : vector<1x9x16x1xf32> to vector<1x1x16x1xf32>
    %108 = vector.shape_cast %107 : vector<1x1x16x1xf32> to vector<16x1xf32>
    %109 = vector.broadcast %108 : vector<16x1xf32> to vector<16x49xf32>
    %110 = arith.mulf %109, %106 : vector<16x49xf32>
    %111 = arith.addf %101, %110 : vector<16x49xf32>
    %112 = vector.extract_strided_slice %2 {offsets = [0, 0, 0, 0], sizes = [1, 1, 16, 1], strides = [1, 1, 1, 1]} : vector<1x3x16x1xf32> to vector<1x1x16x1xf32>
    %113 = vector.shape_cast %112 : vector<1x1x16x1xf32> to vector<16x1xf32>
    %114 = vector.extract_strided_slice %2 {offsets = [0, 1, 0, 0], sizes = [1, 1, 16, 1], strides = [1, 1, 1, 1]} : vector<1x3x16x1xf32> to vector<1x1x16x1xf32>
    %115 = vector.shape_cast %114 : vector<1x1x16x1xf32> to vector<16x1xf32>
    %116 = vector.extract_strided_slice %2 {offsets = [0, 2, 0, 0], sizes = [1, 1, 16, 1], strides = [1, 1, 1, 1]} : vector<1x3x16x1xf32> to vector<1x1x16x1xf32>
    %117 = vector.shape_cast %116 : vector<1x1x16x1xf32> to vector<16x1xf32>
    %118 = vector.broadcast %113 : vector<16x1xf32> to vector<16x49xf32>
    %119 = arith.addf %111, %118 : vector<16x49xf32>
    %cst_34 = arith.constant 0.000000e+00 : f32
    %120 = vector.broadcast %cst_34 : f32 to vector<16x49xf32>
    %121 = arith.subf %120, %119 : vector<16x49xf32>
    %122 = math.exp %121 : vector<16x49xf32>
    %cst_35 = arith.constant 1.000000e+00 : f32
    %123 = vector.broadcast %cst_35 : f32 to vector<16x49xf32>
    %124 = arith.addf %123, %122 : vector<16x49xf32>
    %125 = tpu.reciprocal %124 {approx = true} : vector<16x49xf32> -> vector<16x49xf32>
    %126 = arith.mulf %119, %125 : vector<16x49xf32>
    %127 = vector.broadcast %115 : vector<16x1xf32> to vector<16x49xf32>
    %128 = arith.mulf %126, %127 : vector<16x49xf32>
    %129 = vector.broadcast %117 : vector<16x1xf32> to vector<16x49xf32>
    %130 = arith.addf %128, %129 : vector<16x49xf32>
    %131 = arith.addf %130, %28 : vector<16x49xf32>
    %132 = vector.shape_cast %3 : vector<1x16x16xf32> to vector<16x16xf32>
    %cst_36 = arith.constant dense<0.000000e+00> : vector<16x49xf32>
    %133 = tpu.matmul %132, %131, %cst_36 {dimension_numbers = #tpu.dot_dimension_numbers<[1], [0], [0], [1], [0, 0, 1, 1], [], []>} : vector<16x16xf32>, vector<16x49xf32>, vector<16x49xf32> -> vector<16x49xf32>
    %134 = vector.extract_strided_slice %4 {offsets = [0, 0, 0, 0], sizes = [1, 1, 16, 1], strides = [1, 1, 1, 1]} : vector<1x3x16x1xf32> to vector<1x1x16x1xf32>
    %135 = vector.shape_cast %134 : vector<1x1x16x1xf32> to vector<16x1xf32>
    %136 = vector.extract_strided_slice %4 {offsets = [0, 1, 0, 0], sizes = [1, 1, 16, 1], strides = [1, 1, 1, 1]} : vector<1x3x16x1xf32> to vector<1x1x16x1xf32>
    %137 = vector.shape_cast %136 : vector<1x1x16x1xf32> to vector<16x1xf32>
    %138 = vector.extract_strided_slice %4 {offsets = [0, 2, 0, 0], sizes = [1, 1, 16, 1], strides = [1, 1, 1, 1]} : vector<1x3x16x1xf32> to vector<1x1x16x1xf32>
    %139 = vector.shape_cast %138 : vector<1x1x16x1xf32> to vector<16x1xf32>
    %140 = vector.broadcast %135 : vector<16x1xf32> to vector<16x49xf32>
    %141 = arith.addf %133, %140 : vector<16x49xf32>
    %cst_37 = arith.constant 0.000000e+00 : f32
    %142 = vector.broadcast %cst_37 : f32 to vector<16x49xf32>
    %143 = arith.subf %142, %141 : vector<16x49xf32>
    %144 = math.exp %143 : vector<16x49xf32>
    %cst_38 = arith.constant 1.000000e+00 : f32
    %145 = vector.broadcast %cst_38 : f32 to vector<16x49xf32>
    %146 = arith.addf %145, %144 : vector<16x49xf32>
    %147 = tpu.reciprocal %146 {approx = true} : vector<16x49xf32> -> vector<16x49xf32>
    %148 = arith.mulf %141, %147 : vector<16x49xf32>
    %149 = vector.broadcast %137 : vector<16x1xf32> to vector<16x49xf32>
    %150 = arith.mulf %148, %149 : vector<16x49xf32>
    %151 = vector.broadcast %139 : vector<16x1xf32> to vector<16x49xf32>
    %152 = arith.addf %150, %151 : vector<16x49xf32>
    %cst_39 = arith.constant dense<0.000000e+00> : vector<16xf32>
    %153 = vector.multi_reduction <add>, %152, %cst_39 [1] : vector<16x49xf32> to vector<16xf32>
    %154 = vector.shape_cast %153 : vector<16xf32> to vector<16x1xf32>
    %cst_40 = arith.constant 0.0204081628 : f32
    %155 = vector.broadcast %cst_40 : f32 to vector<16x1xf32>
    %156 = arith.mulf %154, %155 : vector<16x1xf32>
    %c0_41 = arith.constant 0 : index
    %c0_42 = arith.constant 0 : index
    %c0_43 = arith.constant 0 : index
    %157 = vector.load %arg9[%c0_41, %c0_42, %c0_43] : memref<1x16x1xf32, #tpu.memory_space<vmem>>, vector<1x16x1xf32>
    %158 = vector.shape_cast %157 : vector<1x16x1xf32> to vector<16x1xf32>
    %159 = vector.shape_cast %156 : vector<16x1xf32> to vector<1x16x1xf32>
    tpu.vector_store %arg9[%c0_41, %c0_42, %c0_43], %159 {strides = array<i32>} : memref<1x16x1xf32, #tpu.memory_space<vmem>>, vector<1x16x1xf32>,
    return
  }
  func.func @transform_0(%arg0: i32) -> (i32, i32, i32) {
    %c0_i32 = arith.constant 0 : i32
    %c0_i32_0 = arith.constant 0 : i32
    %c0_i32_1 = arith.constant 0 : i32
    return %arg0, %c0_i32, %c0_i32_0 : i32, i32, i32
  }
  func.func @transform_1(%arg0: i32) -> (i32, i32, i32) {
    %c0_i32 = arith.constant 0 : i32
    %c0_i32_0 = arith.constant 0 : i32
    %c0_i32_1 = arith.constant 0 : i32
    %c0_i32_2 = arith.constant 0 : i32
    return %c0_i32, %c0_i32_0, %c0_i32_1 : i32, i32, i32
  }
  func.func @transform_2(%arg0: i32) -> (i32, i32) {
    %c0_i32 = arith.constant 0 : i32
    %c0_i32_0 = arith.constant 0 : i32
    %c0_i32_1 = arith.constant 0 : i32
    return %c0_i32, %c0_i32_0 : i32, i32
  }
  func.func @transform_3(%arg0: i32) -> (i32, i32, i32) {
    %c0_i32 = arith.constant 0 : i32
    %c0_i32_0 = arith.constant 0 : i32
    %c0_i32_1 = arith.constant 0 : i32
    %c0_i32_2 = arith.constant 0 : i32
    return %c0_i32, %c0_i32_0, %c0_i32_1 : i32, i32, i32
  }
  func.func @transform_4(%arg0: i32) -> (i32, i32, i32, i32) {
    %c0_i32 = arith.constant 0 : i32
    %c0_i32_0 = arith.constant 0 : i32
    %c0_i32_1 = arith.constant 0 : i32
    %c0_i32_2 = arith.constant 0 : i32
    %c0_i32_3 = arith.constant 0 : i32
    return %c0_i32, %c0_i32_0, %c0_i32_1, %c0_i32_2 : i32, i32, i32, i32
  }
  func.func @transform_5(%arg0: i32) -> (i32, i32, i32, i32) {
    %c0_i32 = arith.constant 0 : i32
    %c0_i32_0 = arith.constant 0 : i32
    %c0_i32_1 = arith.constant 0 : i32
    %c0_i32_2 = arith.constant 0 : i32
    %c0_i32_3 = arith.constant 0 : i32
    return %c0_i32, %c0_i32_0, %c0_i32_1, %c0_i32_2 : i32, i32, i32, i32
  }
  func.func @transform_6(%arg0: i32) -> (i32, i32, i32) {
    %c0_i32 = arith.constant 0 : i32
    %c0_i32_0 = arith.constant 0 : i32
    %c0_i32_1 = arith.constant 0 : i32
    %c0_i32_2 = arith.constant 0 : i32
    return %c0_i32, %c0_i32_0, %c0_i32_1 : i32, i32, i32
  }
  func.func @transform_7(%arg0: i32) -> (i32, i32, i32, i32) {
    %c0_i32 = arith.constant 0 : i32
    %c0_i32_0 = arith.constant 0 : i32
    %c0_i32_1 = arith.constant 0 : i32
    %c0_i32_2 = arith.constant 0 : i32
    %c0_i32_3 = arith.constant 0 : i32
    return %c0_i32, %c0_i32_0, %c0_i32_1, %c0_i32_2 : i32, i32, i32, i32
  }
  func.func @transform_8(%arg0: i32) -> (i32, i32, i32) {
    %c0_i32 = arith.constant 0 : i32
    %c0_i32_0 = arith.constant 0 : i32
    %c0_i32_1 = arith.constant 0 : i32
    return %arg0, %c0_i32, %c0_i32_0 : i32, i32, i32
  }
}

</mosaic_0001>

<llo_original>
// kernel: tpu_custom_call.1
$region0: #{tpu_custom_call.1}
  #allocation0 [shape = 'u32[]', space=smem, size = 0x4, offset = 0x4, fixed_abs, tag = 'smem constant byte address 0x4 - core index']
  #allocation1 [shape = 'u32[72,128]{1,0:T(1,128)}', space=vmem, size = 0x9000, scoped, tag = 'internal scratch']
  #allocation2 [shape = 'f32[16,65]{1,0:T(8,128)}', space=vmem, size = 0x2000, scoped, tag = 'scratch operand']
  %s0 = inlined_call_operand.vmem [shape: f32[2,144,49], index: 0, kind: input, shape index: {}]
  %s1 = inlined_call_operand.vmem [shape: f32[3,1,49], index: 1, kind: input, shape index: {}]
  %s2 = inlined_call_operand.vmem [shape: f32[16,144], index: 2, kind: input, shape index: {}]
  %s3 = inlined_call_operand.vmem [shape: f32[3,16,1], index: 3, kind: input, shape index: {}]
  %s4 = inlined_call_operand.vmem [shape: f32[1,9,16,1], index: 4, kind: input, shape index: {}]
  %s5 = inlined_call_operand.vmem [shape: f32[1,3,16,1], index: 5, kind: input, shape index: {}]
  %s6 = inlined_call_operand.vmem [shape: f32[1,16,16], index: 6, kind: input, shape index: {}]
  %s7 = inlined_call_operand.vmem [shape: f32[1,3,16,1], index: 7, kind: input, shape index: {}]
  %s8 = inlined_call_operand.vmem [shape: f32[2,16,1], index: 8, kind: output, shape index: {}]
  %s9 = sld [smem:[#allocation0]]
  $region65: #{tpu_custom_call.1} parent=0
    _
  %s11 = ssub.s32 1, %s9
  %s12 = scalar_select 0, %s11, %s9
  loop: start=0, step=1, limit=4
  $region2: #{tpu_custom_call.1} parent=0 // loop_pre_header
    _
  $region3: #{tpu_custom_call.1} parent=0 // loop_header
    %s14 = sphi 0, %s18
    %p15 = scmp.ge.s32.totalorder %s14, 4
    %s24 = sphi 0, %s26
    %s27 = sphi 0, %s24
    %s28 = sphi 0, %s27
    %s44 = sphi 0, %s28
    %s48 = sphi 0, %s48
    %s50 = sphi 0, %s48
    %s51 = sphi 0, %s50
    %s65 = sphi 0, %s51
    %s69 = sphi 0, %s69
    %s71 = sphi 0, %s69
    %s72 = sphi 0, %s71
    %s86 = sphi 0, %s72
    %s90 = sphi 0, %s90
    %s92 = sphi 0, %s90
    %s93 = sphi 0, %s92
    %s107 = sphi 0, %s93
    %s111 = sphi 0, %s111
    %s113 = sphi 0, %s111
    %s114 = sphi 0, %s113
    %s128 = sphi 0, %s114
    %s132 = sphi 0, %s132
    %s134 = sphi 0, %s132
    %s135 = sphi 0, %s134
    %s149 = sphi 0, %s135
    %s153 = sphi 0, %s153
    %s155 = sphi 0, %s153
    %s156 = sphi 0, %s155
    %s170 = sphi 0, %s156
    %s174 = sphi 0, %s174
    %s176 = sphi 0, %s174
    %s177 = sphi 0, %s176
    %s191 = sphi 0, %s177
    %s197 = sphi 0, %s199
    %s200 = sphi 0, %s197
    %s201 = sphi 0, %s200
    %s217 = sphi 0, %s201
  $region4: #{tpu_custom_call.1} parent=0 // loop_header_branch
    %17 = sbr.rel (%p15) target = $region8
  $region5: #{tpu_custom_call.1} parent=0 // loop_body
    %s19 = ssub.s32 %s14, 1
    %s20 = ssub.s32 %s14, 2
    %s21 = sadd.s32 %s14, 1
    %s22 = ssub.s32 %s14, %s21
    %p23 = scmp.eq.s32.totalorder %s22, 0
    %s25 = sadd.s32 %s24, 1
    %s26 = scalar_select %p23, %s24, %s25
    %p29 = pneg %p23
    %p30 = scmp.eq.s32.totalorder %s14, 1
    %p31 = por %p29, %p30
    %p32 = scmp.ne.s32.totalorder %s24, %s27
    %p33 = scmp.eq.s32.totalorder %s14, 0
    %p34 = por %p32, %p33
    %p35 = scmp.ne.s32.totalorder %s24, %s27
    %p36 = scmp.eq.s32.totalorder %s19, 1
    %p37 = por %p35, %p36
    %p38 = scmp.ne.s32.totalorder %s27, %s28
    %p39 = scmp.eq.s32.totalorder %s19, 0
    %p40 = por %p38, %p39
    %p41 = scmp.ne.s32.totalorder %s27, %s28
    %p42 = scmp.eq.s32.totalorder %s20, 1
    %p43 = por %p41, %p42
    %p45 = scmp.ne.s32.totalorder %s28, %s44
    %p46 = scmp.eq.s32.totalorder %s20, 0
    %p47 = por %p45, %p46
    %s49 = sadd.s32 %s48, 1
    %p52 = scmp.eq.s32.totalorder %s14, 1
    %p53 = scmp.ne.s32.totalorder %s48, %s50
    %p54 = scmp.eq.s32.totalorder %s14, 0
    %p55 = por %p53, %p54
    %p56 = scmp.ne.s32.totalorder %s48, %s50
    %p57 = scmp.eq.s32.totalorder %s19, 1
    %p58 = por %p56, %p57
    %p59 = scmp.ne.s32.totalorder %s50, %s51
    %p60 = scmp.eq.s32.totalorder %s19, 0
    %p61 = por %p59, %p60
    %p62 = scmp.ne.s32.totalorder %s50, %s51
    %p63 = scmp.eq.s32.totalorder %s20, 1
    %p64 = por %p62, %p63
    %p66 = scmp.ne.s32.totalorder %s51, %s65
    %p67 = scmp.eq.s32.totalorder %s20, 0
    %p68 = por %p66, %p67
    %s70 = sadd.s32 %s69, 1
    %p73 = scmp.eq.s32.totalorder %s14, 1
    %p74 = scmp.ne.s32.totalorder %s69, %s71
    %p75 = scmp.eq.s32.totalorder %s14, 0
    %p76 = por %p74, %p75
    %p77 = scmp.ne.s32.totalorder %s69, %s71
    %p78 = scmp.eq.s32.totalorder %s19, 1
    %p79 = por %p77, %p78
    %p80 = scmp.ne.s32.totalorder %s71, %s72
    %p81 = scmp.eq.s32.totalorder %s19, 0
    %p82 = por %p80, %p81
    %p83 = scmp.ne.s32.totalorder %s71, %s72
    %p84 = scmp.eq.s32.totalorder %s20, 1
    %p85 = por %p83, %p84
    %p87 = scmp.ne.s32.totalorder %s72, %s86
    %p88 = scmp.eq.s32.totalorder %s20, 0
    %p89 = por %p87, %p88
    %s91 = sadd.s32 %s90, 1
    %p94 = scmp.eq.s32.totalorder %s14, 1
    %p95 = scmp.ne.s32.totalorder %s90, %s92
    %p96 = scmp.eq.s32.totalorder %s14, 0
    %p97 = por %p95, %p96
    %p98 = scmp.ne.s32.totalorder %s90, %s92
    %p99 = scmp.eq.s32.totalorder %s19, 1
    %p100 = por %p98, %p99
    %p101 = scmp.ne.s32.totalorder %s92, %s93
    %p102 = scmp.eq.s32.totalorder %s19, 0
    %p103 = por %p101, %p102
    %p104 = scmp.ne.s32.totalorder %s92, %s93
    %p105 = scmp.eq.s32.totalorder %s20, 1
    %p106 = por %p104, %p105
    %p108 = scmp.ne.s32.totalorder %s93, %s107
    %p109 = scmp.eq.s32.totalorder %s20, 0
    %p110 = por %p108, %p109
    %s112 = sadd.s32 %s111, 1
    %p115 = scmp.eq.s32.totalorder %s14, 1
    %p116 = scmp.ne.s32.totalorder %s111, %s113
    %p117 = scmp.eq.s32.totalorder %s14, 0
    %p118 = por %p116, %p117
    %p119 = scmp.ne.s32.totalorder %s111, %s113
    %p120 = scmp.eq.s32.totalorder %s19, 1
    %p121 = por %p119, %p120
    %p122 = scmp.ne.s32.totalorder %s113, %s114
    %p123 = scmp.eq.s32.totalorder %s19, 0
    %p124 = por %p122, %p123
    %p125 = scmp.ne.s32.totalorder %s113, %s114
    %p126 = scmp.eq.s32.totalorder %s20, 1
    %p127 = por %p125, %p126
    %p129 = scmp.ne.s32.totalorder %s114, %s128
    %p130 = scmp.eq.s32.totalorder %s20, 0
    %p131 = por %p129, %p130
    %s133 = sadd.s32 %s132, 1
    %p136 = scmp.eq.s32.totalorder %s14, 1
    %p137 = scmp.ne.s32.totalorder %s132, %s134
    %p138 = scmp.eq.s32.totalorder %s14, 0
    %p139 = por %p137, %p138
    %p140 = scmp.ne.s32.totalorder %s132, %s134
    %p141 = scmp.eq.s32.totalorder %s19, 1
    %p142 = por %p140, %p141
    %p143 = scmp.ne.s32.totalorder %s134, %s135
    %p144 = scmp.eq.s32.totalorder %s19, 0
    %p145 = por %p143, %p144
    %p146 = scmp.ne.s32.totalorder %s134, %s135
    %p147 = scmp.eq.s32.totalorder %s20, 1
    %p148 = por %p146, %p147
    %p150 = scmp.ne.s32.totalorder %s135, %s149
    %p151 = scmp.eq.s32.totalorder %s20, 0
    %p152 = por %p150, %p151
    %s154 = sadd.s32 %s153, 1
    %p157 = scmp.eq.s32.totalorder %s14, 1
    %p158 = scmp.ne.s32.totalorder %s153, %s155
    %p159 = scmp.eq.s32.totalorder %s14, 0
    %p160 = por %p158, %p159
    %p161 = scmp.ne.s32.totalorder %s153, %s155
    %p162 = scmp.eq.s32.totalorder %s19, 1
    %p163 = por %p161, %p162
    %p164 = scmp.ne.s32.totalorder %s155, %s156
    %p165 = scmp.eq.s32.totalorder %s19, 0
    %p166 = por %p164, %p165
    %p167 = scmp.ne.s32.totalorder %s155, %s156
    %p168 = scmp.eq.s32.totalorder %s20, 1
    %p169 = por %p167, %p168
    %p171 = scmp.ne.s32.totalorder %s156, %s170
    %p172 = scmp.eq.s32.totalorder %s20, 0
    %p173 = por %p171, %p172
    %s175 = sadd.s32 %s174, 1
    %p178 = scmp.eq.s32.totalorder %s14, 1
    %p179 = scmp.ne.s32.totalorder %s174, %s176
    %p180 = scmp.eq.s32.totalorder %s14, 0
    %p181 = por %p179, %p180
    %p182 = scmp.ne.s32.totalorder %s174, %s176
    %p183 = scmp.eq.s32.totalorder %s19, 1
    %p184 = por %p182, %p183
    %p185 = scmp.ne.s32.totalorder %s176, %s177
    %p186 = scmp.eq.s32.totalorder %s19, 0
    %p187 = por %p185, %p186
    %p188 = scmp.ne.s32.totalorder %s176, %s177
    %p189 = scmp.eq.s32.totalorder %s20, 1
    %p190 = por %p188, %p189
    %p192 = scmp.ne.s32.totalorder %s177, %s191
    %p193 = scmp.eq.s32.totalorder %s20, 0
    %p194 = por %p192, %p193
    %s195 = ssub.s32 %s14, %s21
    %p196 = scmp.eq.s32.totalorder %s195, 0
    %s198 = sadd.s32 %s197, 1
    %s199 = scalar_select %p196, %s197, %s198
    %p202 = pneg %p196
    %p203 = scmp.eq.s32.totalorder %s14, 1
    %p204 = por %p202, %p203
    %p205 = scmp.ne.s32.totalorder %s197, %s200
    %p206 = scmp.eq.s32.totalorder %s14, 0
    %p207 = por %p205, %p206
    %p208 = scmp.ne.s32.totalorder %s197, %s200
    %p209 = scmp.eq.s32.totalorder %s19, 1
    %p210 = por %p208, %p209
    %p211 = scmp.ne.s32.totalorder %s200, %s201
    %p212 = scmp.eq.s32.totalorder %s19, 0
    %p213 = por %p211, %p212
    %p214 = scmp.ne.s32.totalorder %s200, %s201
    %p215 = scmp.eq.s32.totalorder %s20, 1
    %p216 = por %p214, %p215
    %p218 = scmp.ne.s32.totalorder %s201, %s217
    %p219 = scmp.eq.s32.totalorder %s20, 0
    %p220 = por %p218, %p219
    %p221 = scmp.le.s32.totalorder 1, %s14
    %p222 = scmp.lt.s32.totalorder %s14, 3
    %p223 = pnand %p221, %p222
    %p224 = pneg %p223
    // Predicated region
    $region9: #{tpu_custom_call.1} parent=5 // pred_check
      _
    $region10: #{tpu_custom_call.1} parent=5 // pred_check_branch
      %226 = sbr.rel (%p223) target = $region12
    $region11: #{tpu_custom_call.1} parent=5 // pred_region
      %s227 = ssub.s32 %s14, 1
      // Predicated region
      $region13: #{tpu_custom_call.1} parent=11 // pred_check
        %p228 = pneg %p61
      $region14: #{tpu_custom_call.1} parent=11 // pred_check_branch
        %230 = sbr.rel (%p228) target = $region16
      $region15: #{tpu_custom_call.1} parent=11 // pred_region
        _
      $region16: #{tpu_custom_call.1} parent=11 // pred_fallthru
        _
      // Predicated region
      $region17: #{tpu_custom_call.1} parent=11 // pred_check
        %p231 = pneg %p82
      $region18: #{tpu_custom_call.1} parent=11 // pred_check_branch
        %233 = sbr.rel (%p231) target = $region20
      $region19: #{tpu_custom_call.1} parent=11 // pred_region
        _
      $region20: #{tpu_custom_call.1} parent=11 // pred_fallthru
        _
      // Predicated region
      $region21: #{tpu_custom_call.1} parent=11 // pred_check
        %p234 = pneg %p103
      $region22: #{tpu_custom_call.1} parent=11 // pred_check_branch
        %236 = sbr.rel (%p234) target = $region24
      $region23: #{tpu_custom_call.1} parent=11 // pred_region
        _
      $region24: #{tpu_custom_call.1} parent=11 // pred_fallthru
        _
      // Predicated region
      $region25: #{tpu_custom_call.1} parent=11 // pred_check
        %p237 = pneg %p124
      $region26: #{tpu_custom_call.1} parent=11 // pred_check_branch
        %239 = sbr.rel (%p237) target = $region28
      $region27: #{tpu_custom_call.1} parent=11 // pred_region
        _
      $region28: #{tpu_custom_call.1} parent=11 // pred_fallthru
        _
      // Predicated region
      $region29: #{tpu_custom_call.1} parent=11 // pred_check
        %p240 = pneg %p145
      $region30: #{tpu_custom_call.1} parent=11 // pred_check_branch
        %242 = sbr.rel (%p240) target = $region32
      $region31: #{tpu_custom_call.1} parent=11 // pred_region
        _
      $region32: #{tpu_custom_call.1} parent=11 // pred_fallthru
        _
      // Predicated region
      $region33: #{tpu_custom_call.1} parent=11 // pred_check
        %p243 = pneg %p166
      $region34: #{tpu_custom_call.1} parent=11 // pred_check_branch
        %245 = sbr.rel (%p243) target = $region36
      $region35: #{tpu_custom_call.1} parent=11 // pred_region
        _
      $region36: #{tpu_custom_call.1} parent=11 // pred_fallthru
        _
      // Predicated region
      $region37: #{tpu_custom_call.1} parent=11 // pred_check
        %p246 = pneg %p187
      $region38: #{tpu_custom_call.1} parent=11 // pred_check_branch
        %248 = sbr.rel (%p246) target = $region40
      $region39: #{tpu_custom_call.1} parent=11 // pred_region
        _
      $region40: #{tpu_custom_call.1} parent=11 // pred_fallthru
        _
    $region12: #{tpu_custom_call.1} parent=5 // pred_fallthru
      _
    %p249 = scmp.lt.s32.totalorder %s14, 2
    // Predicated region
    $region41: #{tpu_custom_call.1} parent=5 // pred_check
      %p250 = pneg %p249
    $region42: #{tpu_custom_call.1} parent=5 // pred_check_branch
      %252 = sbr.rel (%p250) target = $region44
    $region43: #{tpu_custom_call.1} parent=5 // pred_region
      // Predicated region
      $region45: #{tpu_custom_call.1} parent=43 // pred_check
        %p253 = pneg %p34
      $region46: #{tpu_custom_call.1} parent=43 // pred_check_branch
        %255 = sbr.rel (%p253) target = $region48
      $region47: #{tpu_custom_call.1} parent=43 // pred_region
        %p256 = scmp.lt.s32.totalorder %s14, 1
        %s257 = scalar_select %p256, %s14, 1
        %s258 = smul.addr %s257, 18
        %s259 = smul.addr %s258, 8
        %s260 = scalar_lea.vmem %s0, %s259
      $region48: #{tpu_custom_call.1} parent=43 // pred_fallthru
        _
    $region44: #{tpu_custom_call.1} parent=5 // pred_fallthru
      _
    %p261 = scmp.le.s32.totalorder 1, %s14
    %p262 = scmp.lt.s32.totalorder %s14, 3
    %p263 = pnand %p261, %p262
    %p264 = pneg %p263
    // Predicated region
    $region49: #{tpu_custom_call.1} parent=5 // pred_check
      _
    $region50: #{tpu_custom_call.1} parent=5 // pred_check_branch
      %266 = sbr.rel (%p263) target = $region52
    $region51: #{tpu_custom_call.1} parent=5 // pred_region
      %s267 = ssub.s32 %s14, 1
      %p268 = scmp.lt.s32.totalorder %s19, 1
      %s269 = scalar_select %p268, %s19, 1
      %s270 = smul.addr %s269, 18
      %s271 = smul.addr %s270, 8
      %s272 = scalar_lea.vmem %s0, %s271
      %p273 = pneg %p40
      %p274 = pneg %p37
      %p275 = pneg %p61
      %p276 = pneg %p58
      %p277 = pneg %p82
      %p278 = pneg %p79
      %p279 = pneg %p103
      %p280 = pneg %p100
      %p281 = pneg %p124
      %p282 = pneg %p121
      %p283 = pneg %p145
      %p284 = pneg %p142
      %p285 = pneg %p166
      %p286 = pneg %p163
      %p287 = pneg %p187
      %p288 = pneg %p184
      %p289 = pneg %p213
      %p290 = pneg %p210
      %p291 = scmp.lt.s32.totalorder %s19, 1
      %s292 = scalar_select %p291, %s19, 1
      %s293 = smul.addr %s292, 2
      %s294 = smul.addr %s293, 8
      %s295 = scalar_lea.vmem %s8, %s294
      %p296 = scmp.lt.s32.totalorder %s19, 1
      %s297 = scalar_select %p296, %s19, 1
      %s298 = smul.addr %s297, 18
      %s299 = smul.addr %s298, 8
      %s300 = scalar_lea.vmem %s0, %s299
      %p301 = scmp.lt.s32.totalorder %s19, 1
      %s302 = scalar_select %p301, %s19, 1
      %s303 = smul.addr %s302, 2
      %s304 = smul.addr %s303, 8
      %s305 = scalar_lea.vmem %s8, %s304
      %v306 = vld [vmem:[%s3] sm:$0xff]
      %v307 = vld [vmem:[%s3 + $0x8] sm:$0xff]
      %v308 = vld [vmem:[%s3 + $0x10] sm:$0xff]
      %v309 = vld [vmem:[%s3 + $0x18] sm:$0xff]
      %v310 = vld [vmem:[%s3 + $0x20] sm:$0xff]
      %v311 = vld [vmem:[%s3 + $0x28] sm:$0xff]
      %v312 = vld [vmem:[%s4] sm:$0xff]
      %v313 = vld [vmem:[%s4 + $0x8] sm:$0xff]
      %v314 = vld [vmem:[%s4 + $0x10] sm:$0xff]
      %v315 = vld [vmem:[%s4 + $0x18] sm:$0xff]
      %v316 = vld [vmem:[%s4 + $0x20] sm:$0xff]
      %v317 = vld [vmem:[%s4 + $0x28] sm:$0xff]
      %v318 = vld [vmem:[%s4 + $0x30] sm:$0xff]
      %v319 = vld [vmem:[%s4 + $0x38] sm:$0xff]
      %v320 = vld [vmem:[%s4 + $0x40] sm:$0xff]
      %v321 = vld [vmem:[%s4 + $0x48] sm:$0xff]
      %v322 = vld [vmem:[%s4 + $0x50] sm:$0xff]
      %v323 = vld [vmem:[%s4 + $0x58] sm:$0xff]
      %v324 = vld [vmem:[%s4 + $0x60] sm:$0xff]
      %v325 = vld [vmem:[%s4 + $0x68] sm:$0xff]
      %v326 = vld [vmem:[%s4 + $0x70] sm:$0xff]
      %v327 = vld [vmem:[%s4 + $0x78] sm:$0xff]
      %v328 = vld [vmem:[%s4 + $0x80] sm:$0xff]
      %v329 = vld [vmem:[%s4 + $0x88] sm:$0xff]
      %v330 = vld [vmem:[%s5] sm:$0xff]
      %v331 = vld [vmem:[%s5 + $0x8] sm:$0xff]
      %v332 = vld [vmem:[%s5 + $0x10] sm:$0xff]
      %v333 = vld [vmem:[%s5 + $0x18] sm:$0xff]
      %v334 = vld [vmem:[%s5 + $0x20] sm:$0xff]
      %v335 = vld [vmem:[%s5 + $0x28] sm:$0xff]
      %v336 = vld [vmem:[%s6] sm:$0xff]
      %v337 = vld [vmem:[%s6 + $0x8] sm:$0xff]
      %v338 = vld [vmem:[%s7] sm:$0xff]
      %v339 = vld [vmem:[%s7 + $0x8] sm:$0xff]
      %v340 = vld [vmem:[%s7 + $0x10] sm:$0xff]
      %v341 = vld [vmem:[%s7 + $0x18] sm:$0xff]
      %v342 = vld [vmem:[%s7 + $0x20] sm:$0xff]
      %v343 = vld [vmem:[%s7 + $0x28] sm:$0xff]
      %v344 = vld [vmem:[%s1] sm:$0x1]
      %v345 = vld [vmem:[%s1 + $0x2] sm:$0x1]
      %v346 = vld [vmem:[%s2] sm:$0xff]
      %v347 = vld [vmem:[%s2 + $0x8] sm:$0xff]
      %v348 = vld [vmem:[%s2 + $0x10] sm:$0xff]
      %v349 = vld [vmem:[%s2 + $0x18] sm:$0xff]
      %v350 = vld [vmem:[%s300] sm:$0xff]
      %v351 = vld [vmem:[%s300 + $0x8] sm:$0xff]
      %v352 = vld [vmem:[%s300 + $0x10] sm:$0xff]
      %v353 = vld [vmem:[%s300 + $0x18] sm:$0xff]
      %v354 = vld [vmem:[%s300 + $0x20] sm:$0xff]
      %v355 = vld [vmem:[%s300 + $0x28] sm:$0xff]
      %v356 = vld [vmem:[%s300 + $0x30] sm:$0xff]
      %v357 = vld [vmem:[%s300 + $0x38] sm:$0xff]
      %v358 = vld [vmem:[%s300 + $0x40] sm:$0xff]
      %v359 = vld [vmem:[%s300 + $0x48] sm:$0xff]
      %v360 = vld [vmem:[%s300 + $0x50] sm:$0xff]
      %v361 = vld [vmem:[%s300 + $0x58] sm:$0xff]
      %v362 = vld [vmem:[%s300 + $0x60] sm:$0xff]
      %v363 = vld [vmem:[%s300 + $0x68] sm:$0xff]
      %v364 = vld [vmem:[%s300 + $0x70] sm:$0xff]
      %v365 = vld [vmem:[%s300 + $0x78] sm:$0xff]
      %v366 = vld [vmem:[%s300 + $0x80] sm:$0xff]
      %v367 = vld [vmem:[%s300 + $0x88] sm:$0xff]
      %369 = vset.pattern.permute.xlu0 0
      %370 = vperm.xlu0 %369, %v306
      %v371 = vpop.permute.xlu0 %370
      %374 = vset.pattern.permute.xlu0 0
      %375 = vperm.xlu0 %374, %v307
      %v376 = vpop.permute.xlu0 %375
      %vm378 = vcmask 130048
      %v380 = vsel %vm378, %v347, 0
      %v383 = vsel %vm378, %v349, 0
      %385 = vmatpush.msra.mxu0 %v365
      %386 = vmatpush.msra.mxu0 %v364
      %387 = vmatpush.msra.mxu0 %v363
      %388 = vmatpush.msra.mxu0 %v362
      %389 = vmatpush.msra.mxu0 %v361
      %390 = vmatpush.msra.mxu0 %v360
      %391 = vmatpush.msra.mxu0 %v359
      %392 = vmatpush.msra.mxu0 %v358
      %393 = vmatpush.msra.mxu0 %v357
      %394 = vmatpush.msra.mxu0 %v356
      %395 = vmatpush.msra.mxu0 %v355
      %396 = vmatpush.msra.mxu0 %v354
      %397 = vmatpush.msra.mxu0 %v353
      %398 = vmatpush.msra.mxu0 %v352
      %399 = vmatpush.msra.mxu0 %v351
      %400 = vmatpush.msra.mxu0 %v350
      %401 = vmatmul.f32.gmra.mxu0 %v346
      %v402 = vpop.f32.mrf.mxu0
      %v403 = vadd.f32 %v371, %v402
      %404 = vmatmul.f32.gmra.mxu0 %v348
      %v405 = vpop.f32.mrf.mxu0
      %v406 = vadd.f32 %v376, %v405
      %407 = vdwg.mxu0
      %408 = vmatpush.msra.mxu0 0.0
      %409 = vmatpush.msra.mxu0 0.0
      %410 = vmatpush.msra.mxu0 0.0
      %411 = vmatpush.msra.mxu0 0.0
      %412 = vmatpush.msra.mxu0 0.0
      %413 = vmatpush.msra.mxu0 0.0
      %414 = vmatpush.msra.mxu0 0.0
      %415 = vmatpush.msra.mxu0 0.0
      %416 = vmatpush.msra.mxu0 0.0
      %417 = vmatpush.msra.mxu0 0.0
      %418 = vmatpush.msra.mxu0 0.0
      %419 = vmatpush.msra.mxu0 0.0
      %420 = vmatpush.msra.mxu0 0.0
      %421 = vmatpush.msra.mxu0 0.0
      %422 = vmatpush.msra.mxu0 %v367
      %423 = vmatpush.msra.mxu0 %v366
      %424 = vmatmul.f32.gmra.mxu0 %v380
      %v425 = vpop.f32.mrf.mxu0
      %v426 = vadd.f32 %v403, %v425
      %427 = vmatmul.f32.gmra.mxu0 %v383
      %v428 = vpop.f32.mrf.mxu0
      %v429 = vadd.f32 %v406, %v428
      %430 = vdwg.mxu0
      %v431 = vsub.f32 0.0, %v426
      %v432 = vsub.f32 0.0, %v429
      %v433 = vmul.f32 %v431, 1.442695
      %v434 = vpow.pop %v433
      %v435 = vmul.f32 %v432, 1.442695
      %v436 = vpow.pop %v435
      %v437 = vadd.f32 %v434, 1.0
      %v438 = vadd.f32 %v436, 1.0
      %v439 = vrcp.pop %v437
      %v440 = vrcp.pop %v438
      %v441 = vmul.f32 %v426, %v439
      %v442 = vmul.f32 %v429, %v440
      %444 = vset.pattern.permute.xlu0 0
      %445 = vperm.xlu0 %444, %v308
      %v446 = vpop.permute.xlu0 %445
      %449 = vset.pattern.permute.xlu0 0
      %450 = vperm.xlu0 %449, %v309
      %v451 = vpop.permute.xlu0 %450
      %v453 = vmul.f32 %v441, %v446
      %v454 = vmul.f32 %v442, %v451
      %456 = vset.pattern.permute.xlu0 0
      %457 = vperm.xlu0 %456, %v310
      %v458 = vpop.permute.xlu0 %457
      %461 = vset.pattern.permute.xlu0 0
      %462 = vperm.xlu0 %461, %v311
      %v463 = vpop.permute.xlu0 %462
      %v465 = vadd.f32 %v453, %v458
      %v466 = vadd.f32 %v454, %v463
      %vm467 = vcmask 531456
      %468 = vst.msk [vmem:[#allocation2] sm:$0xff] %vm467, 0.0
      %469 = vst.msk [vmem:[#allocation2 + $0x8] sm:$0xff] %vm467, 0.0
      %472 = vrot.lane.b32.xlu0 %v465, 8
      %v473 = vpop.permute.xlu0 %472
      %474 = vrot.lane.b32.xlu0 %v466, 8
      %v475 = vpop.permute.xlu0 %474
      %vm478 = vcmask 465984
      %479 = vst.msk [vmem:[#allocation2] sm:$0xff] %vm478, %v473
      %480 = vst.msk [vmem:[#allocation2 + $0x8] sm:$0xff] %vm478, %v475
      %v481 = vld [vmem:[#allocation2] sm:$0xff]
      %v482 = vld [vmem:[#allocation2 + $0x8] sm:$0xff]
      %v484 = vperm.slane %v344, 0
      %v486 = vmul.f32 %v481, %v484
      %v487 = vmul.f32 %v482, %v484
      %489 = vset.pattern.permute.xlu0 0
      %490 = vperm.xlu0 %489, %v312
      %v491 = vpop.permute.xlu0 %490
      %494 = vset.pattern.permute.xlu0 0
      %495 = vperm.xlu0 %494, %v313
      %v496 = vpop.permute.xlu0 %495
      %v498 = vmul.f32 %v491, %v486
      %v499 = vmul.f32 %v496, %v487
      %v500 = vadd.f32 %v498, 0.0
      %v501 = vadd.f32 %v499, 0.0
      %503 = vset.pattern.permute.xlu0 0
      %504 = vperm.xlu0 %503, %v314
      %v505 = vpop.permute.xlu0 %504
      %508 = vset.pattern.permute.xlu0 0
      %509 = vperm.xlu0 %508, %v315
      %v510 = vpop.permute.xlu0 %509
      %v512 = vmul.f32 %v505, %v481
      %v513 = vmul.f32 %v510, %v482
      %516 = vrot.lane.b32.xlu0 %v512, 127
      %v517 = vpop.permute.xlu0 %516
      %518 = vrot.lane.b32.xlu0 %v513, 127
      %v519 = vpop.permute.xlu0 %518
      %v522 = vadd.f32 %v500, %v517
      %v523 = vadd.f32 %v501, %v519
      %v525 = vperm.slane %v345, 0
      %526 = vrot.lane.b32.xlu0 %v525, 2
      %v527 = vpop.permute.xlu0 %526
      %v529 = vmul.f32 %v481, %v527
      %v530 = vmul.f32 %v482, %v527
      %532 = vset.pattern.permute.xlu0 0
      %533 = vperm.xlu0 %532, %v316
      %v534 = vpop.permute.xlu0 %533
      %537 = vset.pattern.permute.xlu0 0
      %538 = vperm.xlu0 %537, %v317
      %v539 = vpop.permute.xlu0 %538
      %v541 = vmul.f32 %v534, %v529
      %v542 = vmul.f32 %v539, %v530
      %545 = vrot.lane.b32.xlu0 %v541, 126
      %v546 = vpop.permute.xlu0 %545
      %547 = vrot.lane.b32.xlu0 %v542, 126
      %v548 = vpop.permute.xlu0 %547
      %v551 = vadd.f32 %v522, %v546
      %v552 = vadd.f32 %v523, %v548
      %553 = vrot.lane.b32.xlu0 %v484, 7
      %v554 = vpop.permute.xlu0 %553
      %v556 = vmul.f32 %v481, %v554
      %v557 = vmul.f32 %v482, %v554
      %559 = vset.pattern.permute.xlu0 0
      %560 = vperm.xlu0 %559, %v318
      %v561 = vpop.permute.xlu0 %560
      %564 = vset.pattern.permute.xlu0 0
      %565 = vperm.xlu0 %564, %v319
      %v566 = vpop.permute.xlu0 %565
      %v568 = vmul.f32 %v561, %v556
      %v569 = vmul.f32 %v566, %v557
      %572 = vrot.lane.b32.xlu0 %v568, 121
      %v573 = vpop.permute.xlu0 %572
      %574 = vrot.lane.b32.xlu0 %v569, 121
      %v575 = vpop.permute.xlu0 %574
      %v578 = vadd.f32 %v551, %v573
      %v579 = vadd.f32 %v552, %v575
      %581 = vset.pattern.permute.xlu0 0
      %582 = vperm.xlu0 %581, %v320
      %v583 = vpop.permute.xlu0 %582
      %586 = vset.pattern.permute.xlu0 0
      %587 = vperm.xlu0 %586, %v321
      %v588 = vpop.permute.xlu0 %587
      %v590 = vmul.f32 %v583, %v481
      %v591 = vmul.f32 %v588, %v482
      %594 = vrot.lane.b32.xlu0 %v590, 120
      %v595 = vpop.permute.xlu0 %594
      %596 = vrot.lane.b32.xlu0 %v591, 120
      %v597 = vpop.permute.xlu0 %596
      %v600 = vadd.f32 %v578, %v595
      %v601 = vadd.f32 %v579, %v597
      %602 = vrot.lane.b32.xlu0 %v525, 9
      %v603 = vpop.permute.xlu0 %602
      %v605 = vmul.f32 %v481, %v603
      %v606 = vmul.f32 %v482, %v603
      %608 = vset.pattern.permute.xlu0 0
      %609 = vperm.xlu0 %608, %v322
      %v610 = vpop.permute.xlu0 %609
      %613 = vset.pattern.permute.xlu0 0
      %614 = vperm.xlu0 %613, %v323
      %v615 = vpop.permute.xlu0 %614
      %v617 = vmul.f32 %v610, %v605
      %v618 = vmul.f32 %v615, %v606
      %621 = vrot.lane.b32.xlu0 %v617, 119
      %v622 = vpop.permute.xlu0 %621
      %623 = vrot.lane.b32.xlu0 %v618, 119
      %v624 = vpop.permute.xlu0 %623
      %v627 = vadd.f32 %v600, %v622
      %v628 = vadd.f32 %v601, %v624
      %629 = vrot.lane.b32.xlu0 %v484, 14
      %v630 = vpop.permute.xlu0 %629
      %v632 = vmul.f32 %v481, %v630
      %v633 = vmul.f32 %v482, %v630
      %635 = vset.pattern.permute.xlu0 0
      %636 = vperm.xlu0 %635, %v324
      %v637 = vpop.permute.xlu0 %636
      %640 = vset.pattern.permute.xlu0 0
      %641 = vperm.xlu0 %640, %v325
      %v642 = vpop.permute.xlu0 %641
      %v644 = vmul.f32 %v637, %v632
      %v645 = vmul.f32 %v642, %v633
      %648 = vrot.lane.b32.xlu0 %v644, 114
      %v649 = vpop.permute.xlu0 %648
      %650 = vrot.lane.b32.xlu0 %v645, 114
      %v651 = vpop.permute.xlu0 %650
      %v654 = vadd.f32 %v627, %v649
      %v655 = vadd.f32 %v628, %v651
      %657 = vset.pattern.permute.xlu0 0
      %658 = vperm.xlu0 %657, %v326
      %v659 = vpop.permute.xlu0 %658
      %662 = vset.pattern.permute.xlu0 0
      %663 = vperm.xlu0 %662, %v327
      %v664 = vpop.permute.xlu0 %663
      %v666 = vmul.f32 %v659, %v481
      %v667 = vmul.f32 %v664, %v482
      %670 = vrot.lane.b32.xlu0 %v666, 113
      %v671 = vpop.permute.xlu0 %670
      %672 = vrot.lane.b32.xlu0 %v667, 113
      %v673 = vpop.permute.xlu0 %672
      %v676 = vadd.f32 %v654, %v671
      %v677 = vadd.f32 %v655, %v673
      %678 = vrot.lane.b32.xlu0 %v525, 16
      %v679 = vpop.permute.xlu0 %678
      %v681 = vmul.f32 %v481, %v679
      %v682 = vmul.f32 %v482, %v679
      %684 = vset.pattern.permute.xlu0 0
      %685 = vperm.xlu0 %684, %v328
      %v686 = vpop.permute.xlu0 %685
      %689 = vset.pattern.permute.xlu0 0
      %690 = vperm.xlu0 %689, %v329
      %v691 = vpop.permute.xlu0 %690
      %v693 = vmul.f32 %v686, %v681
      %v694 = vmul.f32 %v691, %v682
      %697 = vrot.lane.b32.xlu0 %v693, 112
      %v698 = vpop.permute.xlu0 %697
      %699 = vrot.lane.b32.xlu0 %v694, 112
      %v700 = vpop.permute.xlu0 %699
      %v703 = vadd.f32 %v676, %v698
      %v704 = vadd.f32 %v677, %v700
      %706 = vset.pattern.permute.xlu0 0
      %707 = vperm.xlu0 %706, %v330
      %v708 = vpop.permute.xlu0 %707
      %711 = vset.pattern.permute.xlu0 0
      %712 = vperm.xlu0 %711, %v331
      %v713 = vpop.permute.xlu0 %712
      %v715 = vadd.f32 %v703, %v708
      %v716 = vadd.f32 %v704, %v713
      %v717 = vsub.f32 0.0, %v715
      %v718 = vsub.f32 0.0, %v716
      %v719 = vmul.f32 %v717, 1.442695
      %v720 = vpow.pop %v719
      %v721 = vmul.f32 %v718, 1.442695
      %v722 = vpow.pop %v721
      %v723 = vadd.f32 %v720, 1.0
      %v724 = vadd.f32 %v722, 1.0
      %v725 = vrcp.pop %v723
      %v726 = vrcp.pop %v724
      %v727 = vmul.f32 %v715, %v725
      %v728 = vmul.f32 %v716, %v726
      %730 = vset.pattern.permute.xlu0 0
      %731 = vperm.xlu0 %730, %v332
      %v732 = vpop.permute.xlu0 %731
      %735 = vset.pattern.permute.xlu0 0
      %736 = vperm.xlu0 %735, %v333
      %v737 = vpop.permute.xlu0 %736
      %v739 = vmul.f32 %v727, %v732
      %v740 = vmul.f32 %v728, %v737
      %742 = vset.pattern.permute.xlu0 0
      %743 = vperm.xlu0 %742, %v334
      %v744 = vpop.permute.xlu0 %743
      %747 = vset.pattern.permute.xlu0 0
      %748 = vperm.xlu0 %747, %v335
      %v749 = vpop.permute.xlu0 %748
      %v751 = vadd.f32 %v739, %v744
      %v752 = vadd.f32 %v740, %v749
      %v753 = vadd.f32 %v751, %v465
      %v754 = vadd.f32 %v752, %v466
      %756 = vset.pattern.permute.xlu0 0
      %757 = vperm.xlu0 %756, %v338
      %v758 = vpop.permute.xlu0 %757
      %761 = vset.pattern.permute.xlu0 0
      %762 = vperm.xlu0 %761, %v339
      %v763 = vpop.permute.xlu0 %762
      %v766 = vsel %vm378, %v336, 0
      %v769 = vsel %vm378, %v337, 0
      %771 = vmatpush.msra.mxu0 0.0
      %772 = vmatpush.msra.mxu0 0.0
      %773 = vmatpush.msra.mxu0 0.0
      %774 = vmatpush.msra.mxu0 0.0
      %775 = vmatpush.msra.mxu0 0.0
      %776 = vmatpush.msra.mxu0 0.0
      %777 = vmatpush.msra.mxu0 0.0
      %778 = vmatpush.msra.mxu0 0.0
      %779 = vmatpush.msra.mxu0 0.0
      %780 = vmatpush.msra.mxu0 0.0
      %781 = vmatpush.msra.mxu0 0.0
      %782 = vmatpush.msra.mxu0 0.0
      %783 = vmatpush.msra.mxu0 0.0
      %784 = vmatpush.msra.mxu0 0.0
      %785 = vmatpush.msra.mxu0 %v754
      %786 = vmatpush.msra.mxu0 %v753
      %787 = vmatmul.f32.gmra.mxu0 %v766
      %v788 = vpop.f32.mrf.mxu0
      %v789 = vadd.f32 %v758, %v788
      %790 = vmatmul.f32.gmra.mxu0 %v769
      %v791 = vpop.f32.mrf.mxu0
      %v792 = vadd.f32 %v763, %v791
      %793 = vdwg.mxu0
      %v794 = vsub.f32 0.0, %v789
      %v795 = vsub.f32 0.0, %v792
      %v796 = vmul.f32 %v794, 1.442695
      %v797 = vpow.pop %v796
      %v798 = vmul.f32 %v795, 1.442695
      %v799 = vpow.pop %v798
      %v800 = vadd.f32 %v797, 1.0
      %v801 = vadd.f32 %v799, 1.0
      %v802 = vrcp.pop %v800
      %v803 = vrcp.pop %v801
      %v804 = vmul.f32 %v789, %v802
      %v805 = vmul.f32 %v792, %v803
      %807 = vset.pattern.permute.xlu0 0
      %808 = vperm.xlu0 %807, %v340
      %v809 = vpop.permute.xlu0 %808
      %812 = vset.pattern.permute.xlu0 0
      %813 = vperm.xlu0 %812, %v341
      %v814 = vpop.permute.xlu0 %813
      %v816 = vmul.f32 %v804, %v809
      %v817 = vmul.f32 %v805, %v814
      %819 = vset.pattern.permute.xlu0 0
      %820 = vperm.xlu0 %819, %v342
      %v821 = vpop.permute.xlu0 %820
      %824 = vset.pattern.permute.xlu0 0
      %825 = vperm.xlu0 %824, %v343
      %v826 = vpop.permute.xlu0 %825
      %v828 = vadd.f32 %v816, %v821
      %v829 = vadd.f32 %v817, %v826
      %vm830 = vcmask 400384
      %v831 = vsel %vm830, %v828, 0.0
      %832 = vadd.xlane.f32.xlu0 %v831
      %v833 = vpop.xlane.xlu0 %832
      %v834 = vsel %vm830, %v829, 0.0
      %835 = vadd.xlane.f32.xlu0 %v834
      %v836 = vpop.xlane.xlu0 %835
      %v837 = vmul.f32 %v833, 0.020408163
      %v838 = vmul.f32 %v836, 0.020408163
      %vm839 = vcmask 7168
      %840 = vst.msk [vmem:[%s305] sm:$0xff] %vm839, %v837
      %841 = vst.msk [vmem:[%s305 + $0x8] sm:$0xff] %vm839, %v838
      %p842 = scmp.lt.s32.totalorder %s19, 1
      %s843 = scalar_select %p842, %s19, 1
      %s844 = smul.addr %s843, 2
      %s845 = smul.addr %s844, 8
      %s846 = scalar_lea.vmem %s8, %s845
      // Predicated region
      $region53: #{tpu_custom_call.1} parent=51 // pred_check
        %p847 = pneg %p210
      $region54: #{tpu_custom_call.1} parent=51 // pred_check_branch
        %849 = sbr.rel (%p847) target = $region56
      $region55: #{tpu_custom_call.1} parent=51 // pred_region
        _
      $region56: #{tpu_custom_call.1} parent=51 // pred_fallthru
        _
    $region52: #{tpu_custom_call.1} parent=5 // pred_fallthru
      _
    %p850 = scmp.le.s32.totalorder 2, %s14
    // Predicated region
    $region57: #{tpu_custom_call.1} parent=5 // pred_check
      %p851 = pneg %p850
    $region58: #{tpu_custom_call.1} parent=5 // pred_check_branch
      %853 = sbr.rel (%p851) target = $region60
    $region59: #{tpu_custom_call.1} parent=5 // pred_region
      %s854 = ssub.s32 %s14, 2
      // Predicated region
      $region61: #{tpu_custom_call.1} parent=59 // pred_check
        %p855 = pneg %p216
      $region62: #{tpu_custom_call.1} parent=59 // pred_check_branch
        %857 = sbr.rel (%p855) target = $region64
      $region63: #{tpu_custom_call.1} parent=59 // pred_region
        %p858 = scmp.lt.s32.totalorder %s20, 1
        %s859 = scalar_select %p858, %s20, 1
        %s860 = smul.addr %s859, 2
        %s861 = smul.addr %s860, 8
        %s862 = scalar_lea.vmem %s8, %s861
      $region64: #{tpu_custom_call.1} parent=59 // pred_fallthru
        _
    $region60: #{tpu_custom_call.1} parent=5 // pred_fallthru
      _
  $region6: #{tpu_custom_call.1} parent=0 // loop_footer
    %s18 = sadd.s32 1, %s14
  $region7: #{tpu_custom_call.1} parent=0 // loop_footer_branch
    %13 = sbr.rel target = $region3
  $region8: #{tpu_custom_call.1} parent=0 // loop_exit
    _

</llo_original>
